<compile_context>
chip_gen: v7x
topology: tpu7x:2x2x1
jax: 0.10.0
libtpu: 0.0.40
codegen_flags: <defaults>
</compile_context>

<pallas_src>
import functools
import numpy as np
import jax
import jax.numpy as jnp
from jax.experimental import pallas as pl
from jax.experimental.pallas import tpu as pltpu

SELU_ALPHA = 1.6732632423543772
SELU_SCALE = 1.0507009873554805
NEG_INF = -1e30          # finite "-inf": keeps fully-masked rows NaN-free


def _selu(x):
    return SELU_SCALE * jnp.where(x > 0, x, SELU_ALPHA * (jnp.exp(x) - 1.0))


def _layernorm(x, eps=1e-6):
    mean = jnp.mean(x, axis=-1, keepdims=True)
    var = jnp.mean((x - mean) ** 2, axis=-1, keepdims=True)
    return (x - mean) * jax.lax.rsqrt(var + eps)


def _pair_swap(x):
    """out[..., 2m] = x[..., 2m+1]; out[..., 2m+1] = x[..., 2m] (no MXU work)."""
    left = jnp.roll(x, -1, axis=-1)     # left[..., i]  = x[..., i+1]
    right = jnp.roll(x, 1, axis=-1)     # right[..., i] = x[..., i-1]
    lane = jax.lax.broadcasted_iota(jnp.int32, x.shape, x.ndim - 1)
    return jnp.where(lane % 2 == 0, left, right)


def _default_vmem_limit():
    # ~75% of physical VMEM (96 MiB on v5e/v6e, 48 MiB on v7x); safe fallback.
    try:
        cap = int(pltpu.get_tpu_info().vmem_capacity_bytes)
        return (cap * 3) // 4
    except Exception:
        return 48 * 1024 * 1024


_VMEM_LIMIT = _default_vmem_limit()


# --------------------------------------------------------------------------
# Generic row-tiled linear kernel (token embedding / time embedding)
# --------------------------------------------------------------------------
def _linear_kernel(x_ref, wt_ref, b_ref, o_ref):
    w = wt_ref[...]
    o_ref[...] = (
        jnp.dot(x_ref[...].astype(w.dtype), w, preferred_element_type=jnp.float32)
        + b_ref[...]
    )


def linear_pallas(x2d, wt, b2, *, block_m=512):
    """y = x2d @ wt + b2 (wt pre-transposed to (in, out); b2 shaped (1, out))."""
    M, Kin = x2d.shape
    N = wt.shape[1]
    bm = M if M <= block_m else block_m
    return pl.pallas_call(
        _linear_kernel,
        out_shape=jax.ShapeDtypeStruct((M, N), jnp.float32),
        grid=(pl.cdiv(M, bm),),
        in_specs=[
            pl.BlockSpec((bm, Kin), lambda i: (i, 0)),
            pl.BlockSpec((Kin, N), lambda i: (0, 0)),
            pl.BlockSpec((1, N), lambda i: (0, 0)),
        ],
        out_specs=pl.BlockSpec((bm, N), lambda i: (i, 0)),
        compiler_params=pltpu.CompilerParams(
            dimension_semantics=("parallel",),
            vmem_limit_bytes=_VMEM_LIMIT),
    )(x2d, wt, b2)


# --------------------------------------------------------------------------
# Fused TransformerLayer kernel (one batch element per grid step)
# --------------------------------------------------------------------------
def _transformer_layer_kernel(*refs, C, nh, d, has_bias, mxu_dtype):
    if has_bias:
        (x_ref, c_ref, cq_ref, sq_ref, ck_ref, sk_ref, bias_ref,
         wada_ref, bada_ref, wqkv_ref, bqkv_ref,
         w1_ref, b1_ref, w2_ref, b2_ref, o_ref) = refs
    else:
        (x_ref, c_ref, cq_ref, sq_ref, ck_ref, sk_ref,
         wada_ref, bada_ref, wqkv_ref, bqkv_ref,
         w1_ref, b1_ref, w2_ref, b2_ref, o_ref) = refs
        bias_ref = None

    x = x_ref[...]                                  # (n_t, C)  f32
    c = c_ref[...]                                  # (1, C)    f32

    # adaLN modulation: SELU(c) @ Wada^T + b  ->  6 chunks of C
    mod = (
        jnp.dot(_selu(c).astype(mxu_dtype), wada_ref[...],
                preferred_element_type=jnp.float32)
        + bada_ref[...]
    )
    shift, scale, gate = mod[:, 0:C], mod[:, C:2 * C], mod[:, 2 * C:3 * C]
    shift_f, scale_f, gate_f = (
        mod[:, 3 * C:4 * C], mod[:, 4 * C:5 * C], mod[:, 5 * C:6 * C])

    # --------------- attention branch ---------------
    xm = _layernorm(x) * (1.0 + scale) + shift
    qkv = (
        jnp.dot(xm.astype(mxu_dtype), wqkv_ref[...],
                preferred_element_type=jnp.float32)
        + bqkv_ref[...]
    )
    q, k, v = qkv[:, 0:C], qkv[:, C:2 * C], qkv[:, 2 * C:3 * C]

    # RoPE/XPOS rotation: elementwise mul + pair swap (sin sign and zeta / 1/zeta
    # folded into the precomputed tables) — no MXU work.
    q = q * cq_ref[...] + _pair_swap(q) * sq_ref[...]
    k = k * ck_ref[...] + _pair_swap(k) * sk_ref[...]

    # head-batched attention on (nh, n_t, d)
    qc = q.astype(mxu_dtype)
    kc = k.astype(mxu_dtype)
    vc = v.astype(mxu_dtype)
    qh = jnp.stack([qc[:, h * d:(h + 1) * d] for h in range(nh)], axis=0)
    kh = jnp.stack([kc[:, h * d:(h + 1) * d] for h in range(nh)], axis=0)
    vh = jnp.stack([vc[:, h * d:(h + 1) * d] for h in range(nh)], axis=0)

    inv_tp = 1.0 / float((2.0 * d) ** 0.5)
    s = jnp.einsum('hqd,hkd->hqk', qh, kh,
                   preferred_element_type=jnp.float32) * inv_tp
    if has_bias:
        s = s + bias_ref[...]                       # (1, n_t) -> (nh, n_t, n_t)
    s = s - jnp.max(s, axis=-1, keepdims=True)
    p = jnp.exp(s)
    p = p * pl.reciprocal(jnp.sum(p, axis=-1, keepdims=True), approx=True)
    ctx = jnp.einsum('hqk,hkd->hqd', p.astype(mxu_dtype), vh,
                     preferred_element_type=jnp.float32)
    attn = jnp.concatenate([ctx[h] for h in range(nh)], axis=-1)   # (n_t, C)

    x = x + gate * attn

    # --------------- FFN branch (dropout = identity in eval) ---------------
    xm2 = _layernorm(x) * (1.0 + scale_f) + shift_f
    hdn = _selu(
        jnp.dot(xm2.astype(mxu_dtype), w1_ref[...],
                preferred_element_type=jnp.float32) + b1_ref[...])
    ff = (
        jnp.dot(hdn.astype(mxu_dtype), w2_ref[...],
                preferred_element_type=jnp.float32) + b2_ref[...]
    )
    o_ref[...] = x + gate_f * ff


def transformer_layer(x, c, rope_tab, bias, lp, nh):
    n_b, n_t, C = x.shape
    d = C // nh
    cq, sq, ck, sk = rope_tab
    mxu_dtype = lp["wqkv_t"].dtype
    has_bias = bias is not None

    kernel = functools.partial(
        _transformer_layer_kernel, C=C, nh=nh, d=d,
        has_bias=has_bias, mxu_dtype=mxu_dtype)

    table_spec = pl.BlockSpec((n_t, C), lambda b: (0, 0))
    in_specs = [
        pl.BlockSpec((None, n_t, C), lambda b: (b, 0, 0)),      # x
        pl.BlockSpec((None, 1, C), lambda b: (b, 0, 0)),        # c
        table_spec, table_spec, table_spec, table_spec,          # RoPE tables
    ]
    inputs = [x, c, cq, sq, ck, sk]
    if has_bias:
        in_specs.append(pl.BlockSpec((None, 1, n_t), lambda b: (b, 0, 0)))
        inputs.append(bias)
    in_specs += [
        pl.BlockSpec((C, 6 * C), lambda b: (0, 0)),             # Wada^T
        pl.BlockSpec((1, 6 * C), lambda b: (0, 0)),
        pl.BlockSpec((C, 3 * C), lambda b: (0, 0)),             # Wqkv^T
        pl.BlockSpec((1, 3 * C), lambda b: (0, 0)),
        pl.BlockSpec((C, 4 * C), lambda b: (0, 0)),             # W1^T
        pl.BlockSpec((1, 4 * C), lambda b: (0, 0)),
        pl.BlockSpec((4 * C, C), lambda b: (0, 0)),             # W2^T
        pl.BlockSpec((1, C), lambda b: (0, 0)),
    ]
    inputs += [lp["wada_t"], lp["bada"], lp["wqkv_t"], lp["bqkv"],
               lp["w1_t"], lp["b1"], lp["w2_t"], lp["b2"]]

    return pl.pallas_call(
        kernel,
        out_shape=jax.ShapeDtypeStruct((n_b, n_t, C), jnp.float32),
        grid=(n_b,),
        in_specs=in_specs,
        out_specs=pl.BlockSpec((None, n_t, C), lambda b: (b, 0, 0)),
        compiler_params=pltpu.CompilerParams(
            dimension_semantics=("parallel",),
            vmem_limit_bytes=_VMEM_LIMIT),
    )(*inputs)


# --------------------------------------------------------------------------
# FinalLayer kernel
# --------------------------------------------------------------------------
def _final_layer_kernel(*refs, C, return_logits, mxu_dtype):
    if return_logits:
        x_ref, c_ref, wada_ref, bada_ref, wlin_ref, blin_ref, o_ref = refs
    else:
        x_ref, c_ref, wada_ref, bada_ref, o_ref = refs
    x = x_ref[...]
    c = c_ref[...]
    mod = (
        jnp.dot(_selu(c).astype(mxu_dtype), wada_ref[...],
                preferred_element_type=jnp.float32)
        + bada_ref[...]
    )
    shift, scale = mod[:, 0:C], mod[:, C:2 * C]
    xm = _layernorm(x) * (1.0 + scale) + shift
    if return_logits:
        o_ref[...] = (
            jnp.dot(xm.astype(mxu_dtype), wlin_ref[...],
                    preferred_element_type=jnp.float32)
            + blin_ref[...]
        )
    else:
        o_ref[...] = xm


def final_layer(x, c, params, return_logits):
    n_b, n_t, C = x.shape
    mxu_dtype = params["fada_w_t"].dtype
    K = params["flin_w_t"].shape[1]
    out_dim = K if return_logits else C
    kernel = functools.partial(_final_layer_kernel, C=C,
                               return_logits=return_logits, mxu_dtype=mxu_dtype)
    in_specs = [
        pl.BlockSpec((None, n_t, C), lambda b: (b, 0, 0)),
        pl.BlockSpec((None, 1, C), lambda b: (b, 0, 0)),
        pl.BlockSpec((C, 2 * C), lambda b: (0, 0)),
        pl.BlockSpec((1, 2 * C), lambda b: (0, 0)),
    ]
    inputs = [x, c, params["fada_w_t"], params["fada_b2"]]
    if return_logits:
        in_specs += [pl.BlockSpec((C, K), lambda b: (0, 0)),
                     pl.BlockSpec((1, K), lambda b: (0, 0))]
        inputs += [params["flin_w_t"], params["flin_b2"]]
    return pl.pallas_call(
        kernel,
        out_shape=jax.ShapeDtypeStruct((n_b, n_t, out_dim), jnp.float32),
        grid=(n_b,),
        in_specs=in_specs,
        out_specs=pl.BlockSpec((None, n_t, out_dim), lambda b: (b, 0, 0)),
        compiler_params=pltpu.CompilerParams(
            dimension_semantics=("parallel",),
            vmem_limit_bytes=_VMEM_LIMIT),
    )(*inputs)


# --------------------------------------------------------------------------
# RoPE / XPOS tables (host-side precompute; sign and zeta scaling folded in)
# --------------------------------------------------------------------------
def rope_tables(n_t, C, nh):
    """Returns cos_q, sin_q, cos_k, sin_k, each (n_t, C):
       q' = q*cos_q + pair_swap(q)*sin_q;  k' = k*cos_k + pair_swap(k)*sin_k."""
    d = C // nh
    i = np.arange(0, d, 2, dtype=np.float64) / d
    theta_half = np.power(10000.0, -i)
    zeta_half = (i + 0.4) / 1.4
    theta = np.zeros((d,)); theta[0::2] = theta_half; theta[1::2] = theta_half
    zeta = np.zeros((d,)); zeta[0::2] = zeta_half; zeta[1::2] = zeta_half
    pos = np.arange(n_t, dtype=np.float64)[:, None]
    cos = np.cos(pos * theta[None, :])
    sin = np.sin(pos * theta[None, :])
    ze = np.power(zeta[None, :], pos / C)
    sign = np.ones((d,)); sign[0::2] = -1.0        # -sin on even lanes, +sin on odd
    cq = cos * ze
    sq = sin * sign * ze
    ck = cos / ze
    sk = sin * sign / ze
    tile = lambda a: jnp.asarray(np.tile(a, (1, nh)), jnp.float32)
    return tile(cq), tile(sq), tile(ck), tile(sk)


# --------------------------------------------------------------------------
# Full ChemBFN forward
# --------------------------------------------------------------------------
def chembfn_forward(params, x, t, mask=None, y=None, *, C, nh):
    n_b, n_t, K = x.shape
    # time embedding: Linear(1, C//2) -> SELU -> Linear(C//2, C)   (tiny, f32)
    h = linear_pallas(t.reshape(n_b, 1), params["te1_w_t"], params["te1_b2"])
    h = _selu(h)
    c = linear_pallas(h, params["te2_w_t"], params["te2_b2"]).reshape(n_b, 1, C)
    if y is not None:
        c = c + y

    rope_tab = rope_tables(n_t, C, nh)

    # token embedding: Linear(num_vocab, C), row-tiled GEMM
    xe = linear_pallas(
        x.reshape(n_b * n_t, K), params["emb_w_t"], params["emb_b2"]
    ).reshape(n_b, n_t, C)

    if mask is not None:
        keep = (mask[:, :, 0] != 0)                                  # keys only
        bias = jnp.where(keep, 0.0, NEG_INF).astype(jnp.float32)[:, None, :]
    else:
        bias = None                                                  # skip entirely

    for lp in params["layers"]:
        xe = transformer_layer(xe, c, rope_tab, bias, lp, nh)

    return final_layer(xe, c, params, return_logits=(mask is None))


# --------------------------------------------------------------------------
# Parameter handling: torch-layout init + one-time kernel-layout preparation
# --------------------------------------------------------------------------
def init_params(key, K, C, L, nh):
    def lin(k, out_f, in_f, s=0.05):
        k1, k2 = jax.random.split(k)
        return (s * jax.random.normal(k1, (out_f, in_f), jnp.float32),
                s * jax.random.normal(k2, (out_f,), jnp.float32))

    keys = jax.random.split(key, 5 + L)
    params = {}
    params["emb_w"], params["emb_b"] = lin(keys[0], C, K)
    params["te1_w"], params["te1_b"] = lin(keys[1], C // 2, 1)
    params["te2_w"], params["te2_b"] = lin(keys[2], C, C // 2)
    layers = []
    for l in range(L):
        kl = jax.random.split(keys[3 + l], 4)
        lp = {}
        lp["wada"], lp["bada"] = lin(kl[0], 6 * C, C)
        lp["wqkv"], lp["bqkv"] = lin(kl[1], 3 * C, C)
        lp["w1"], lp["b1"] = lin(kl[2], 4 * C, C)
        lp["w2"], lp["b2"] = lin(kl[3], C, 4 * C)
        layers.append(lp)
    params["layers"] = layers
    params["fada_w"], params["fada_b"] = lin(keys[3 + L], 2 * C, C)
    params["flin_w"], params["flin_b"] = lin(keys[4 + L], K, C)
    return params


def prepare_params(raw, compute_dtype=jnp.bfloat16):
    """One-time conversion: pre-transposed weights (cast to the MXU compute
    dtype), (1, out)-shaped f32 biases.  Done once, outside the forward."""
    def wt(w):
        return jnp.asarray(jnp.transpose(w), compute_dtype)

    def b2(b):
        return jnp.asarray(b, jnp.float32).reshape(1, -1)

    p = {
        "emb_w_t": wt(raw["emb_w"]), "emb_b2": b2(raw["emb_b"]),
        # time embedding is tiny — keep f32
        "te1_w_t": jnp.asarray(jnp.transpose(raw["te1_w"]), jnp.float32),
        "te1_b2": b2(raw["te1_b"]),
        "te2_w_t": jnp.asarray(jnp.transpose(raw["te2_w"]), jnp.float32),
        "te2_b2": b2(raw["te2_b"]),
        "fada_w_t": wt(raw["fada_w"]), "fada_b2": b2(raw["fada_b"]),
        "flin_w_t": wt(raw["flin_w"]), "flin_b2": b2(raw["flin_b"]),
        "layers": [],
    }
    for lp in raw["layers"]:
        p["layers"].append({
            "wada_t": wt(lp["wada"]), "bada": b2(lp["bada"]),
            "wqkv_t": wt(lp["wqkv"]), "bqkv": b2(lp["bqkv"]),
            "w1_t": wt(lp["w1"]), "b1": b2(lp["b1"]),
            "w2_t": wt(lp["w2"]), "b2": b2(lp["b2"]),
        })
    return p


# --------------------------------------------------------------------------
# Pure numpy (float64) reference for validation
# --------------------------------------------------------------------------
def _np_selu(x):
    return SELU_SCALE * np.where(x > 0, x, SELU_ALPHA * (np.exp(x) - 1.0))


def _np_ln(x):
    m = x.mean(-1, keepdims=True)
    v = ((x - m) ** 2).mean(-1, keepdims=True)
    return (x - m) / np.sqrt(v + 1e-6)


def _np_softmax(x):
    x = x - x.max(-1, keepdims=True)
    e = np.exp(x)
    return e / e.sum(-1, keepdims=True)


def ref_forward(params, x, t, y, C, nh, K, key_mask=None):
    p = jax.tree_util.tree_map(lambda a: np.asarray(a, np.float64), params)
    x = np.asarray(x, np.float64)
    t = np.asarray(t, np.float64)
    y = np.asarray(y, np.float64)
    n_b, n_t, _ = x.shape
    d = C // nh
    h = _np_selu(t.reshape(n_b, 1) @ p["te1_w"].T + p["te1_b"])
    c = (h @ p["te2_w"].T + p["te2_b"]).reshape(n_b, 1, C) + y
    i = np.arange(0, d, 2) / d
    th_half = 10000.0 ** (-i)
    ze_half = (i + 0.4) / 1.4
    theta = np.zeros(d); theta[0::2] = th_half; theta[1::2] = th_half
    zeta = np.zeros(d); zeta[0::2] = ze_half; zeta[1::2] = ze_half
    pos = np.arange(n_t)[:, None]
    cos = np.cos(pos * theta); sin = np.sin(pos * theta); ze = zeta ** (pos / C)
    if key_mask is not None:
        bias = np.where(np.asarray(key_mask, bool), 0.0, -np.inf)[:, None, :]
    else:
        bias = None
    xe = x @ p["emb_w"].T + p["emb_b"]
    for lp in p["layers"]:
        mod = _np_selu(c) @ lp["wada"].T + lp["bada"]
        sh, sc, g, shf, scf, gf = np.split(mod, 6, -1)
        xm = _np_ln(xe) * (1 + sc) + sh
        qkv = xm @ lp["wqkv"].T + lp["bqkv"]
        q, k, v = np.split(qkv, 3, -1)
        attn = np.zeros_like(xe)
        for hh in range(nh):
            qh = q[..., hh * d:(hh + 1) * d]
            kh = k[..., hh * d:(hh + 1) * d]
            vh = v[..., hh * d:(hh + 1) * d]
            qr = np.zeros_like(qh); qr[..., 0::2] = -qh[..., 1::2]; qr[..., 1::2] = qh[..., 0::2]
            kr = np.zeros_like(kh); kr[..., 0::2] = -kh[..., 1::2]; kr[..., 1::2] = kh[..., 0::2]
            qh = (qh * cos + qr * sin) * ze
            kh = (kh * cos + kr * sin) / ze
            s = qh @ kh.transpose(0, 2, 1) / (2 * d) ** 0.5
            if bias is not None:
                s = s + bias
            attn[..., hh * d:(hh + 1) * d] = _np_softmax(s) @ vh
        xe = xe + g * attn
        xm2 = _np_ln(xe) * (1 + scf) + shf
        ff = _np_selu(xm2 @ lp["w1"].T + lp["b1"]) @ lp["w2"].T + lp["b2"]
        xe = xe + gf * ff
    modf = _np_selu(c) @ p["fada_w"].T + p["fada_b"]
    sh, sc = np.split(modf, 2, -1)
    xm = _np_ln(xe) * (1 + sc) + sh
    if key_mask is not None:
        return xm
    return xm @ p["flin_w"].T + p["flin_b"]


if __name__ == "__main__":
    # small shapes consistent with the module
    K, C, L, NH = 16, 32, 2, 4     # num_vocab, channel, num_layer, num_head
    n_b, n_t = 2, 8

    key = jax.random.PRNGKey(0)
    kp, kx, kt, ky = jax.random.split(key, 4)
    raw = init_params(kp, K, C, L, NH)

    x = jax.nn.softmax(jax.random.normal(kx, (n_b, n_t, K), jnp.float32), axis=-1)
    t = jax.random.uniform(kt, (n_b, 1, 1), dtype=jnp.float32)
    y = 0.1 * jax.random.normal(ky, (n_b, 1, C), jnp.float32)

    # TODO(synk): training-mode dropout (p=0.01) is not modelled; eval-mode
    # (identity) semantics are implemented.

    ref = ref_forward(raw, x, t, y, C, NH, K)

    # --- structural check: f32 MXU path, tight tolerance ---
    params_f32 = prepare_params(raw, compute_dtype=jnp.float32)
    out_f32 = jax.block_until_ready(
        chembfn_forward(params_f32, x, t, mask=None, y=y, C=C, nh=NH))
    assert out_f32.shape == (n_b, n_t, K)
    np.testing.assert_allclose(np.asarray(out_f32), ref, rtol=1e-2, atol=3e-3)

    # --- default path: bf16 MXU operands, looser tolerance ---
    params_bf16 = prepare_params(raw)                  # compute_dtype = bfloat16
    out_bf16 = jax.block_until_ready(
        chembfn_forward(params_bf16, x, t, mask=None, y=y, C=C, nh=NH))
    assert out_bf16.shape == (n_b, n_t, K)
    np.testing.assert_allclose(np.asarray(out_bf16), ref, rtol=5e-2, atol=2e-2)

    # --- masked path (key mask; returns token embeddings) ---
    mask = jnp.ones((n_b, n_t, 1), jnp.float32).at[:, n_t - 2:, :].set(0.0)
    out_m = jax.block_until_ready(
        chembfn_forward(params_bf16, x, t, mask=mask, y=y, C=C, nh=NH))
    assert out_m.shape == (n_b, n_t, C)
    ref_m = ref_forward(raw, x, t, y, C, NH, K,
                        key_mask=np.asarray(mask)[:, :, 0])
    np.testing.assert_allclose(np.asarray(out_m), ref_m, rtol=5e-2, atol=2e-2)

    print("KERNEL_OK")
</pallas_src>

<mosaic_0001>
module attributes {stable_mosaic.version = 11 : i64} {
  func.func @_linear_kernel(%arg0: i32, %arg1: memref<2x1xf32, #tpu.memory_space<vmem>>, %arg2: memref<1x16xf32, #tpu.memory_space<vmem>>, %arg3: memref<1x16xf32, #tpu.memory_space<vmem>>, %arg4: memref<2x16xf32, #tpu.memory_space<vmem>>) attributes {dimension_semantics = [#tpu.dimension_semantics<parallel>], iteration_bounds = array<i64: 1>, scalar_prefetch = 0 : i64, scratch_operands = 0 : i64, tpu.core_type = #tpu.core_type<tc>, window_params = [{transform_indices = @transform_0, window_bounds = array<i64: 2, 1>}, {pipeline_mode = #tpu.pipeline_mode<synchronous>, transform_indices = @transform_1, window_bounds = array<i64: 1, 16>}, {pipeline_mode = #tpu.pipeline_mode<synchronous>, transform_indices = @transform_2, window_bounds = array<i64: 1, 16>}, {transform_indices = @transform_3, window_bounds = array<i64: 2, 16>}]} {
    %c0 = arith.constant 0 : index
    %c0_0 = arith.constant 0 : index
    %0 = vector.load %arg2[%c0, %c0_0] : memref<1x16xf32, #tpu.memory_space<vmem>>, vector<1x16xf32>
    %c0_1 = arith.constant 0 : index
    %c0_2 = arith.constant 0 : index
    %1 = vector.load %arg1[%c0_1, %c0_2] : memref<2x1xf32, #tpu.memory_space<vmem>>, vector<2x1xf32>
    %cst = arith.constant dense<0.000000e+00> : vector<2x16xf32>
    %2 = tpu.matmul %1, %0, %cst {dimension_numbers = #tpu.dot_dimension_numbers<[1], [0], [0], [1], [0, 0, 1, 1], [], []>} : vector<2x1xf32>, vector<1x16xf32>, vector<2x16xf32> -> vector<2x16xf32>
    %c0_3 = arith.constant 0 : index
    %c0_4 = arith.constant 0 : index
    %3 = vector.load %arg3[%c0_3, %c0_4] : memref<1x16xf32, #tpu.memory_space<vmem>>, vector<1x16xf32>
    %4 = vector.broadcast %3 : vector<1x16xf32> to vector<2x16xf32>
    %5 = arith.addf %2, %4 : vector<2x16xf32>
    %c0_5 = arith.constant 0 : index
    %c0_6 = arith.constant 0 : index
    %6 = vector.load %arg4[%c0_5, %c0_6] : memref<2x16xf32, #tpu.memory_space<vmem>>, vector<2x16xf32>
    tpu.vector_store %arg4[%c0_5, %c0_6], %5 {strides = array<i32>} : memref<2x16xf32, #tpu.memory_space<vmem>>, vector<2x16xf32>,
    return
  }
  func.func @transform_0(%arg0: i32) -> (i32, i32) {
    %c0_i32 = arith.constant 0 : i32
    %c0_i32_0 = arith.constant 0 : i32
    return %arg0, %c0_i32 : i32, i32
  }
  func.func @transform_1(%arg0: i32) -> (i32, i32) {
    %c0_i32 = arith.constant 0 : i32
    %c0_i32_0 = arith.constant 0 : i32
    %c0_i32_1 = arith.constant 0 : i32
    return %c0_i32, %c0_i32_0 : i32, i32
  }
  func.func @transform_2(%arg0: i32) -> (i32, i32) {
    %c0_i32 = arith.constant 0 : i32
    %c0_i32_0 = arith.constant 0 : i32
    %c0_i32_1 = arith.constant 0 : i32
    return %c0_i32, %c0_i32_0 : i32, i32
  }
  func.func @transform_3(%arg0: i32) -> (i32, i32) {
    %c0_i32 = arith.constant 0 : i32
    %c0_i32_0 = arith.constant 0 : i32
    return %arg0, %c0_i32 : i32, i32
  }
}

</mosaic_0001>

<llo_original>
// kernel: tpu_custom_call.1
$region0: #{tpu_custom_call.1}
  #allocation0 [shape = 'u32[]', space=smem, size = 0x4, offset = 0x4, fixed_abs, tag = 'smem constant byte address 0x4 - core index']
  #allocation1 [shape = 'u32[144,128]{1,0:T(1,128)}', space=vmem, size = 0x12000, scoped, tag = 'internal scratch']
  %s0 = inlined_call_operand.vmem [shape: f32[2,1], index: 0, kind: input, shape index: {}]
  %s1 = inlined_call_operand.vmem [shape: f32[1,16], index: 1, kind: input, shape index: {}]
  %s2 = inlined_call_operand.vmem [shape: f32[1,16], index: 2, kind: input, shape index: {}]
  %s3 = inlined_call_operand.hbm [shape: f32[2,16], index: 3, kind: output, shape index: {}]
  %s4 = sld [smem:[#allocation0]]
  $region22: #{tpu_custom_call.1} parent=0
    _
  %s6 = ssub.s32 1, %s4
  %s7 = scalar_select 0, %s6, %s4
  $region1: #{tpu_custom_call.1} parent=0
    #allocation2 [shape = 'u8[1024]{0}', space=vmem, size = 0x400, scoped, tag = 'output window, operand 0, single buffered']
    #allocation3 [shape = 's32[1]{0}', space=sflag, size = 0x4, scoped, tag = 'scoped memory for tpu_custom_call.1']
    %8 = vsyncpa [#allocation3], 0
    // Predicated region
    $region2: #{tpu_custom_call.1} parent=1 // pred_check
      _
    $region3: #{tpu_custom_call.1} parent=1 // pred_check_branch
      %10 = sbr.rel (0) target = $region5
    $region4: #{tpu_custom_call.1} parent=1 // pred_region
      _
    $region5: #{tpu_custom_call.1} parent=1 // pred_fallthru
      _
    // Predicated region
    $region6: #{tpu_custom_call.1} parent=1 // pred_check
      _
    $region7: #{tpu_custom_call.1} parent=1 // pred_check_branch
      %12 = sbr.rel (0) target = $region9
    $region8: #{tpu_custom_call.1} parent=1 // pred_region
      _
    $region9: #{tpu_custom_call.1} parent=1 // pred_fallthru
      _
    // Predicated region
    $region10: #{tpu_custom_call.1} parent=1 // pred_check
      _
    $region11: #{tpu_custom_call.1} parent=1 // pred_check_branch
      %14 = sbr.rel (0) target = $region13
    $region12: #{tpu_custom_call.1} parent=1 // pred_region
      _
    $region13: #{tpu_custom_call.1} parent=1 // pred_fallthru
      _
    %v15 = vld [vmem:[%s1] sm:$0x1]
    %v16 = vld [vmem:[%s0] sm:$0x3]
    %v17 = vld [vmem:[%s2] sm:$0x1]
    %v19 = vlaneseq
    %v20 = vshrl.u32 %v19, 7
    %v21 = vsub.s32 0, %v20
    %v22 = vrot.slane %v17, %v21
    %vm24 = vcmask 7168
    %v26 = vsel %vm24, %v16, 0
    %vm28 = vcmask 1040384
    %v30 = vsel %vm28, %v15, 0
    %32 = vmatprep.subr.mxu0 0.0
    %33 = vmatpush1.msra.mxu0 %v30
    %34 = vmatprep.subr.mxu0 0.0
    %35 = vmatpush1.msra.mxu0 0.0
    %36 = vmatprep.subr.mxu0 0.0
    %37 = vmatpush1.msra.mxu0 0.0
    %38 = vmatprep.subr.mxu0 0.0
    %39 = vmatpush1.msra.mxu0 0.0
    %40 = vmatprep.subr.mxu0 0.0
    %41 = vmatpush1.msra.mxu0 0.0
    %42 = vmatprep.subr.mxu0 0.0
    %43 = vmatpush1.msra.mxu0 0.0
    %44 = vmatprep.subr.mxu0 0.0
    %45 = vmatpush1.msra.mxu0 0.0
    %46 = vmatprep.subr.mxu0 0.0
    %47 = vmatpush1.msra.mxu0 0.0
    %48 = vmatprep.subr.mxu0 0.0
    %49 = vmatpush1.msra.mxu0 0.0
    %50 = vmatprep.subr.mxu0 0.0
    %51 = vmatpush1.msra.mxu0 0.0
    %52 = vmatprep.subr.mxu0 0.0
    %53 = vmatpush1.msra.mxu0 0.0
    %54 = vmatprep.subr.mxu0 0.0
    %55 = vmatpush1.msra.mxu0 0.0
    %56 = vmatprep.subr.mxu0 0.0
    %57 = vmatpush1.msra.mxu0 0.0
    %58 = vmatprep.subr.mxu0 0.0
    %59 = vmatpush1.msra.mxu0 0.0
    %60 = vmatprep.subr.mxu0 0.0
    %61 = vmatpush1.msra.mxu0 0.0
    %62 = vmatprep.subr.mxu0 0.0
    %63 = vmatpush1.msra.mxu0 0.0
    %64 = vmatprep.subr.mxu0 0.0
    %65 = vmatpush1.msra.mxu0 0.0
    %66 = vmatprep.subr.mxu0 0.0
    %67 = vmatpush1.msra.mxu0 0.0
    %68 = vmatprep.subr.mxu0 0.0
    %69 = vmatpush1.msra.mxu0 0.0
    %70 = vmatprep.subr.mxu0 0.0
    %71 = vmatpush1.msra.mxu0 0.0
    %72 = vmatprep.subr.mxu0 0.0
    %73 = vmatpush1.msra.mxu0 0.0
    %74 = vmatprep.subr.mxu0 0.0
    %75 = vmatpush1.msra.mxu0 0.0
    %76 = vmatprep.subr.mxu0 0.0
    %77 = vmatpush1.msra.mxu0 0.0
    %78 = vmatprep.subr.mxu0 0.0
    %79 = vmatpush1.msra.mxu0 0.0
    %80 = vmatprep.subr.mxu0 0.0
    %81 = vmatpush1.msra.mxu0 0.0
    %82 = vmatprep.subr.mxu0 0.0
    %83 = vmatpush1.msra.mxu0 0.0
    %84 = vmatprep.subr.mxu0 0.0
    %85 = vmatpush1.msra.mxu0 0.0
    %86 = vmatprep.subr.mxu0 0.0
    %87 = vmatpush1.msra.mxu0 0.0
    %88 = vmatprep.subr.mxu0 0.0
    %89 = vmatpush1.msra.mxu0 0.0
    %90 = vmatprep.subr.mxu0 0.0
    %91 = vmatpush1.msra.mxu0 0.0
    %92 = vmatprep.subr.mxu0 0.0
    %93 = vmatpush1.msra.mxu0 0.0
    %94 = vmatprep.subr.mxu0 0.0
    %95 = vmatpush1.msra.mxu0 0.0
    %96 = vmatprep.mubr.f32.mxu0 0.0
    %97 = vmatmul.mubr.f32.gmra.mrb[0].mxu0 %v26
    %v98 = vpop.f32.mrb[0].mxu0
    %v99 = vadd.f32 %v22, %v98
    %v100 = vpop.f32.mrb[0].mxu0
    %101 = vdwg.mxu0
    %vm102 = vcmask 123904
    %103 = vst.msk [vmem:[#allocation2] sm:$0x3] %vm102, %v99
    // Predicated region
    $region14: #{tpu_custom_call.1} parent=1 // pred_check
      _
    $region15: #{tpu_custom_call.1} parent=1 // pred_check_branch
      %105 = sbr.rel (0) target = $region17
    $region16: #{tpu_custom_call.1} parent=1 // pred_region
      %s107 = ssub.s32 32, 32
      %108 = vsyncadd [#allocation3], %s107
      %s110 = sshll.u32 [#allocation2], 4
      %s111 = int_to_ptr.vmem [resolvable:$true] %s110
      %113 = dma.vmem_to_hbm [thread:$0]  %s111, 32, %s3, [#allocation3]
    $region17: #{tpu_custom_call.1} parent=1 // pred_fallthru
      _
    // Predicated region
    $region18: #{tpu_custom_call.1} parent=1 // pred_check
      _
    $region19: #{tpu_custom_call.1} parent=1 // pred_check_branch
      %115 = sbr.rel (0) target = $region21
    $region20: #{tpu_custom_call.1} parent=1 // pred_region
      %116 = dma.done [#allocation3], 32
    $region21: #{tpu_custom_call.1} parent=1 // pred_fallthru
      _
    %117 = vsyncpa [#allocation3], 1

</llo_original>
